<compile_context>
chip_gen: v7x
topology: tpu7x:2x2x1
jax: 0.10.0
libtpu: 0.0.40
codegen_flags: <defaults>
</compile_context>

<pallas_src>
import functools

import jax
import jax.numpy as jnp
from jax.experimental import pallas as pl
from jax.experimental.pallas import tpu as pltpu


def _round_up(n, m):
    return ((n + m - 1) // m) * m


def _pad_axis(a, axis, new_size):
    pad = new_size - a.shape[axis]
    if pad == 0:
        return a
    widths = [(0, 0)] * a.ndim
    widths[axis] = (0, pad)
    return jnp.pad(a, widths)


# ---------------------------------------------------------------------------
# Kernel 1: serial recurrence  x_{t+1} = x_t @ W_A + v_t
#   v_ref, xs_ref : (TB, BT, X) time-block for this grid step
#   wa_ref        : (X, X)      (constant across the grid)
#   x_sc          : (BT, X)     recurrent state carried across the time axis
# Emits the PRE-update state x_t for every timestep (what the heads consume).
# ---------------------------------------------------------------------------
def _recurrence_kernel(v_ref, wa_ref, xs_ref, x_sc):
    @pl.when(pl.program_id(1) == 0)
    def _():
        x_sc[...] = jnp.zeros_like(x_sc)  # x_0 = zeros

    wa = wa_ref[...]
    tb = xs_ref.shape[0]

    def body(i, x_t):
        xs_ref[i] = x_t
        return jnp.dot(x_t, wa, preferred_element_type=jnp.float32) + v_ref[i]

    x_sc[...] = jax.lax.fori_loop(0, tb, body, x_sc[...], unroll=True)


# ---------------------------------------------------------------------------
# Kernel 2: fused nonlinear heads over a tile of rows (rows = flattened T*B)
#   x_ref : (TM, X)
#   w1    : (X, 2X)   = [Cy_lin^T | Cz_lin^T],     b1 : (1, 2X)
#   w2    : (2X, YZ)  = blockdiag(Cy_lin2^T, Cz_lin2^T), b2 : (1, YZ)
#   o_ref : (TM, YZ)  = sigmoid(relu(x@w1 + b1) @ w2 + b2)
# ---------------------------------------------------------------------------
def _heads_kernel(x_ref, w1_ref, b1_ref, w2_ref, b2_ref, o_ref):
    h = jnp.dot(x_ref[...], w1_ref[...], preferred_element_type=jnp.float32) + b1_ref[...]
    h = jnp.maximum(h, 0.0)
    o = jnp.dot(h, w2_ref[...], preferred_element_type=jnp.float32) + b2_ref[...]
    o_ref[...] = jax.nn.sigmoid(o)


@functools.partial(jax.jit, static_argnames=("x_size",))
def custom_rnn_forward(y, u, params, *, x_size):
    """y: (B, T, y_size), u: (B, T, u_size) -> (yhat (B,T,yh), zhat (B,T,zh))."""
    B, T, y_size = y.shape
    u_size = u.shape[-1]
    X = x_size
    yh = params["wy2"].shape[-1]
    zh = params["wz2"].shape[-1]
    YZ = yh + zh

    f32 = jnp.float32
    wa = params["wa"].astype(f32)
    wk = params["wk"].astype(f32)
    wb = params["wb"].astype(f32)
    ba = params["ba"].astype(f32)
    bk = params["bk"].astype(f32)
    bb = params["bb"].astype(f32)

    # --- layout: time-major, pad batch to sublane multiple, pad T to TB ----
    y_tm = jnp.transpose(y, (1, 0, 2)).astype(f32)   # (T, B, y)
    u_tm = jnp.transpose(u, (1, 0, 2)).astype(f32)   # (T, B, u)

    B_pad = _round_up(B, 8)
    TB = 32 if T >= 32 else T                        # time block per grid step
    T_pad = _round_up(T, TB)

    y_tm = _pad_axis(_pad_axis(y_tm, 1, B_pad), 0, T_pad)
    u_tm = _pad_axis(_pad_axis(u_tm, 1, B_pad), 0, T_pad)

    # --- hoisted fused input projection (one batched GEMM, off the loop) ---
    #   v_t = y_t @ W_K + u_t @ W_B + (ba + bk + bb)
    wku = jnp.concatenate([wk, wb], axis=0)          # (y+u, X)
    bias_v = ba + bk + bb                            # (1, X)
    yu = jnp.concatenate([y_tm, u_tm], axis=-1)      # (T_pad, B_pad, y+u)
    v = jnp.einsum("tbf,fx->tbx", yu, wku) + bias_v  # (T_pad, B_pad, X)
    v = v.astype(f32)

    # --- Pallas kernel 1: the serial recurrence (only x_t @ W_A per step) ---
    BT = B_pad                                       # single batch tile
    xs = pl.pallas_call(
        _recurrence_kernel,
        out_shape=jax.ShapeDtypeStruct((T_pad, B_pad, X), f32),
        grid_spec=pltpu.PrefetchScalarGridSpec(
            num_scalar_prefetch=0,
            grid=(B_pad // BT, T_pad // TB),
            in_specs=[
                pl.BlockSpec((TB, BT, X), lambda b, t: (t, b, 0)),
                pl.BlockSpec((X, X), lambda b, t: (0, 0)),
            ],
            out_specs=pl.BlockSpec((TB, BT, X), lambda b, t: (t, b, 0)),
            scratch_shapes=[pltpu.VMEM((BT, X), f32)],
        ),
        compiler_params=pltpu.CompilerParams(
            dimension_semantics=("parallel", "arbitrary"),  # time carries state
        ),
    )(v, wa)

    # --- Pallas kernel 2: both heads, batched over all T*B rows ------------
    w1 = jnp.concatenate([params["wy1"].astype(f32), params["wz1"].astype(f32)], axis=1)  # (X, 2X)
    b1 = jnp.concatenate([params["by1"].astype(f32), params["bz1"].astype(f32)], axis=1)  # (1, 2X)
    w2 = jnp.zeros((2 * X, YZ), f32)
    w2 = w2.at[:X, :yh].set(params["wy2"].astype(f32))
    w2 = w2.at[X:, yh:].set(params["wz2"].astype(f32))                                    # blockdiag
    b2 = jnp.concatenate([params["by2"].astype(f32), params["bz2"].astype(f32)], axis=1)  # (1, YZ)

    N = T_pad * B_pad
    xs_flat = xs.reshape(N, X)
    TM = 256 if N >= 256 else N                      # row tile (N is mult of 8)
    N_pad = _round_up(N, TM)
    xs_flat = _pad_axis(xs_flat, 0, N_pad)

    out = pl.pallas_call(
        _heads_kernel,
        out_shape=jax.ShapeDtypeStruct((N_pad, YZ), f32),
        grid_spec=pltpu.PrefetchScalarGridSpec(
            num_scalar_prefetch=0,
            grid=(N_pad // TM,),
            in_specs=[
                pl.BlockSpec((TM, X), lambda i: (i, 0)),
                pl.BlockSpec((X, 2 * X), lambda i: (0, 0)),
                pl.BlockSpec((1, 2 * X), lambda i: (0, 0)),
                pl.BlockSpec((2 * X, YZ), lambda i: (0, 0)),
                pl.BlockSpec((1, YZ), lambda i: (0, 0)),
            ],
            out_specs=pl.BlockSpec((TM, YZ), lambda i: (i, 0)),
        ),
        compiler_params=pltpu.CompilerParams(
            dimension_semantics=("parallel",),
        ),
    )(xs_flat, w1, b1, w2, b2)

    out = out[:N].reshape(T_pad, B_pad, YZ)[:T, :B]  # (T, B, yh+zh)
    yhat = jnp.transpose(out[..., :yh], (1, 0, 2))   # (B, T, yh)
    zhat = jnp.transpose(out[..., yh:], (1, 0, 2))   # (B, T, zh)
    return yhat, zhat


def init_params(key, x_size, y_size, u_size, yhat_size, zhat_size):
    """Deterministic synthetic parameters. Weights stored transposed (in, out)
    so kernels compute x @ W, matching torch.nn.Linear's x @ W^T + b."""
    ks = jax.random.split(key, 14)

    def lin(kw, kb, fan_in, fan_out):
        bound = 1.0 / jnp.sqrt(fan_in)
        w = jax.random.uniform(kw, (fan_in, fan_out), jnp.float32, -bound, bound)
        b = jax.random.uniform(kb, (1, fan_out), jnp.float32, -bound, bound)
        return w, b

    wa, ba = lin(ks[0], ks[1], x_size, x_size)
    wk, bk = lin(ks[2], ks[3], y_size, x_size)
    wb, bb = lin(ks[4], ks[5], u_size, x_size)
    wy1, by1 = lin(ks[6], ks[7], x_size, x_size)
    wy2, by2 = lin(ks[8], ks[9], x_size, yhat_size)
    wz1, bz1 = lin(ks[10], ks[11], x_size, x_size)
    wz2, bz2 = lin(ks[12], ks[13], x_size, zhat_size)
    return dict(
        wa=wa, ba=ba, wk=wk, bk=bk, wb=wb, bb=bb,
        wy1=wy1, by1=by1, wy2=wy2, by2=by2,
        wz1=wz1, bz1=bz1, wz2=wz2, bz2=bz2,
    )


def _reference_forward(y, u, params, x_size):
    """Pure-JAX reference replicating the PyTorch loop semantics."""
    B, T, _ = y.shape
    x_t = jnp.zeros((B, x_size), jnp.float32)
    y_hats, z_hats = [], []
    for t in range(T):
        y_t = y[:, t, :].astype(jnp.float32)
        u_t = u[:, t, :].astype(jnp.float32)
        hy = jnp.maximum(x_t @ params["wy1"] + params["by1"], 0.0)
        yp = jax.nn.sigmoid(hy @ params["wy2"] + params["by2"])
        hz = jnp.maximum(x_t @ params["wz1"] + params["bz1"], 0.0)
        zp = jax.nn.sigmoid(hz @ params["wz2"] + params["bz2"])
        y_hats.append(yp)
        z_hats.append(zp)
        x_t = (x_t @ params["wa"] + params["ba"]
               + y_t @ params["wk"] + params["bk"]
               + u_t @ params["wb"] + params["bb"])
    return jnp.stack(y_hats, axis=1), jnp.stack(z_hats, axis=1)


if __name__ == "__main__":
    # Small shapes consistent with the module's forward.
    B, T = 2, 8
    x_size, y_size, u_size = 32, 8, 4
    yhat_size, zhat_size = 8, 4

    key = jax.random.PRNGKey(0)
    kp, ky, ku = jax.random.split(key, 3)
    params = init_params(kp, x_size, y_size, u_size, yhat_size, zhat_size)

    y = jax.random.normal(ky, (B, T, y_size), jnp.float32)
    u = jax.random.normal(ku, (B, T, u_size), jnp.float32)

    yhat, zhat = custom_rnn_forward(y, u, params, x_size=x_size)
    jax.block_until_ready((yhat, zhat))

    # Sanity check against a pure-JAX reference of the same recurrence.
    yref, zref = _reference_forward(y, u, params, x_size)
    assert yhat.shape == (B, T, yhat_size) and zhat.shape == (B, T, zhat_size)
    assert jnp.allclose(yhat, yref, atol=2e-5), float(jnp.abs(yhat - yref).max())
    assert jnp.allclose(zhat, zref, atol=2e-5), float(jnp.abs(zhat - zref).max())

    print("KERNEL_OK")
</pallas_src>

<mosaic_0001>
module attributes {stable_mosaic.version = 11 : i64} {
  func.func @_heads_kernel(%arg0: i32, %arg1: memref<64x32xf32, #tpu.memory_space<vmem>>, %arg2: memref<32x64xf32, #tpu.memory_space<vmem>>, %arg3: memref<1x64xf32, #tpu.memory_space<vmem>>, %arg4: memref<64x12xf32, #tpu.memory_space<vmem>>, %arg5: memref<1x12xf32, #tpu.memory_space<vmem>>, %arg6: memref<64x12xf32, #tpu.memory_space<vmem>>) attributes {dimension_semantics = [#tpu.dimension_semantics<parallel>], iteration_bounds = array<i64: 1>, scalar_prefetch = 0 : i64, scratch_operands = 0 : i64, tpu.core_type = #tpu.core_type<tc>, window_params = [{transform_indices = @transform_0, window_bounds = array<i64: 64, 32>}, {pipeline_mode = #tpu.pipeline_mode<synchronous>, transform_indices = @transform_1, window_bounds = array<i64: 32, 64>}, {pipeline_mode = #tpu.pipeline_mode<synchronous>, transform_indices = @transform_2, window_bounds = array<i64: 1, 64>}, {pipeline_mode = #tpu.pipeline_mode<synchronous>, transform_indices = @transform_3, window_bounds = array<i64: 64, 12>}, {pipeline_mode = #tpu.pipeline_mode<synchronous>, transform_indices = @transform_4, window_bounds = array<i64: 1, 12>}, {transform_indices = @transform_5, window_bounds = array<i64: 64, 12>}]} {
    %c0 = arith.constant 0 : index
    %c0_0 = arith.constant 0 : index
    %0 = vector.load %arg1[%c0, %c0_0] : memref<64x32xf32, #tpu.memory_space<vmem>>, vector<64x32xf32>
    %c0_1 = arith.constant 0 : index
    %c0_2 = arith.constant 0 : index
    %1 = vector.load %arg2[%c0_1, %c0_2] : memref<32x64xf32, #tpu.memory_space<vmem>>, vector<32x64xf32>
    %cst = arith.constant dense<0.000000e+00> : vector<64x64xf32>
    %2 = tpu.matmul %0, %1, %cst {dimension_numbers = #tpu.dot_dimension_numbers<[1], [0], [0], [1], [0, 0, 1, 1], [], []>} : vector<64x32xf32>, vector<32x64xf32>, vector<64x64xf32> -> vector<64x64xf32>
    %c0_3 = arith.constant 0 : index
    %c0_4 = arith.constant 0 : index
    %3 = vector.load %arg3[%c0_3, %c0_4] : memref<1x64xf32, #tpu.memory_space<vmem>>, vector<1x64xf32>
    %4 = vector.broadcast %3 : vector<1x64xf32> to vector<64x64xf32>
    %5 = arith.addf %2, %4 : vector<64x64xf32>
    %cst_5 = arith.constant 0.000000e+00 : f32
    %6 = vector.broadcast %cst_5 : f32 to vector<64x64xf32>
    %7 = arith.maximumf %5, %6 : vector<64x64xf32>
    %c0_6 = arith.constant 0 : index
    %c0_7 = arith.constant 0 : index
    %8 = vector.load %arg4[%c0_6, %c0_7] : memref<64x12xf32, #tpu.memory_space<vmem>>, vector<64x12xf32>
    %cst_8 = arith.constant dense<0.000000e+00> : vector<64x12xf32>
    %9 = tpu.matmul %7, %8, %cst_8 {dimension_numbers = #tpu.dot_dimension_numbers<[1], [0], [0], [1], [0, 0, 1, 1], [], []>} : vector<64x64xf32>, vector<64x12xf32>, vector<64x12xf32> -> vector<64x12xf32>
    %c0_9 = arith.constant 0 : index
    %c0_10 = arith.constant 0 : index
    %10 = vector.load %arg5[%c0_9, %c0_10] : memref<1x12xf32, #tpu.memory_space<vmem>>, vector<1x12xf32>
    %11 = vector.broadcast %10 : vector<1x12xf32> to vector<64x12xf32>
    %12 = arith.addf %9, %11 : vector<64x12xf32>
    %13 = arith.negf %12 : vector<64x12xf32>
    %14 = math.exp %13 : vector<64x12xf32>
    %cst_11 = arith.constant 1.000000e+00 : f32
    %15 = vector.broadcast %cst_11 : f32 to vector<64x12xf32>
    %16 = arith.addf %15, %14 : vector<64x12xf32>
    %17 = arith.divf %15, %16 : vector<64x12xf32>
    %c0_12 = arith.constant 0 : index
    %c0_13 = arith.constant 0 : index
    %18 = vector.load %arg6[%c0_12, %c0_13] : memref<64x12xf32, #tpu.memory_space<vmem>>, vector<64x12xf32>
    tpu.vector_store %arg6[%c0_12, %c0_13], %17 {strides = array<i32>} : memref<64x12xf32, #tpu.memory_space<vmem>>, vector<64x12xf32>,
    return
  }
  func.func @transform_0(%arg0: i32) -> (i32, i32) {
    %c0_i32 = arith.constant 0 : i32
    %c0_i32_0 = arith.constant 0 : i32
    return %arg0, %c0_i32 : i32, i32
  }
  func.func @transform_1(%arg0: i32) -> (i32, i32) {
    %c0_i32 = arith.constant 0 : i32
    %c0_i32_0 = arith.constant 0 : i32
    %c0_i32_1 = arith.constant 0 : i32
    return %c0_i32, %c0_i32_0 : i32, i32
  }
  func.func @transform_2(%arg0: i32) -> (i32, i32) {
    %c0_i32 = arith.constant 0 : i32
    %c0_i32_0 = arith.constant 0 : i32
    %c0_i32_1 = arith.constant 0 : i32
    return %c0_i32, %c0_i32_0 : i32, i32
  }
  func.func @transform_3(%arg0: i32) -> (i32, i32) {
    %c0_i32 = arith.constant 0 : i32
    %c0_i32_0 = arith.constant 0 : i32
    %c0_i32_1 = arith.constant 0 : i32
    return %c0_i32, %c0_i32_0 : i32, i32
  }
  func.func @transform_4(%arg0: i32) -> (i32, i32) {
    %c0_i32 = arith.constant 0 : i32
    %c0_i32_0 = arith.constant 0 : i32
    %c0_i32_1 = arith.constant 0 : i32
    return %c0_i32, %c0_i32_0 : i32, i32
  }
  func.func @transform_5(%arg0: i32) -> (i32, i32) {
    %c0_i32 = arith.constant 0 : i32
    %c0_i32_0 = arith.constant 0 : i32
    return %arg0, %c0_i32 : i32, i32
  }
}

module attributes {stable_mosaic.version = 11 : i64} {
  func.func @_recurrence_kernel(%arg0: i32, %arg1: i32, %arg2: memref<8x8x32xf32, #tpu.memory_space<vmem>>, %arg3: memref<32x32xf32, #tpu.memory_space<vmem>>, %arg4: memref<8x8x32xf32, #tpu.memory_space<vmem>>, %arg5: memref<8x32xf32, #tpu.memory_space<vmem>>) attributes {dimension_semantics = [#tpu.dimension_semantics<parallel>, #tpu.dimension_semantics<arbitrary>], iteration_bounds = array<i64: 1, 1>, scalar_prefetch = 0 : i64, scratch_operands = 1 : i64, tpu.core_type = #tpu.core_type<tc>, window_params = [{transform_indices = @transform_0, window_bounds = array<i64: 8, 8, 32>}, {pipeline_mode = #tpu.pipeline_mode<synchronous>, transform_indices = @transform_1, window_bounds = array<i64: 32, 32>}, {transform_indices = @transform_2, window_bounds = array<i64: 8, 8, 32>}]} {
    %c0_i32 = arith.constant 0 : i32
    %0 = arith.cmpi eq, %arg1, %c0_i32 : i32
    %1 = arith.extui %0 : i1 to i32
    %c0_i32_0 = arith.constant 0 : i32
    %2 = arith.cmpi ne, %1, %c0_i32_0 : i32
    scf.if %2 {
      %cst_46 = arith.constant 0.000000e+00 : f32
      %78 = vector.broadcast %cst_46 : f32 to vector<8x32xf32>
      %c0_47 = arith.constant 0 : index
      %c0_48 = arith.constant 0 : index
      %79 = vector.load %arg5[%c0_47, %c0_48] : memref<8x32xf32, #tpu.memory_space<vmem>>, vector<8x32xf32>
      tpu.vector_store %arg5[%c0_47, %c0_48], %78 {strides = array<i32>} : memref<8x32xf32, #tpu.memory_space<vmem>>, vector<8x32xf32>,
    } else {
    }
    %c0 = arith.constant 0 : index
    %c0_1 = arith.constant 0 : index
    %3 = vector.load %arg3[%c0, %c0_1] : memref<32x32xf32, #tpu.memory_space<vmem>>, vector<32x32xf32>
    %c0_2 = arith.constant 0 : index
    %c0_3 = arith.constant 0 : index
    %4 = vector.load %arg5[%c0_2, %c0_3] : memref<8x32xf32, #tpu.memory_space<vmem>>, vector<8x32xf32>
    %c0_i32_4 = arith.constant 0 : i32
    %5 = arith.index_cast %c0_i32_4 : i32 to index
    %c0_5 = arith.constant 0 : index
    %c0_6 = arith.constant 0 : index
    %6 = vector.load %arg4[%5, %c0_5, %c0_6] : memref<8x8x32xf32, #tpu.memory_space<vmem>>, vector<1x8x32xf32>
    %7 = vector.shape_cast %6 : vector<1x8x32xf32> to vector<8x32xf32>
    %8 = vector.shape_cast %4 : vector<8x32xf32> to vector<1x8x32xf32>
    tpu.vector_store %arg4[%5, %c0_5, %c0_6], %8 {strides = array<i32>} : memref<8x8x32xf32, #tpu.memory_space<vmem>>, vector<1x8x32xf32>,
    %cst = arith.constant dense<0.000000e+00> : vector<8x32xf32>
    %9 = tpu.matmul %4, %3, %cst {dimension_numbers = #tpu.dot_dimension_numbers<[1], [0], [0], [1], [0, 0, 1, 1], [], []>} : vector<8x32xf32>, vector<32x32xf32>, vector<8x32xf32> -> vector<8x32xf32>
    %10 = arith.index_cast %c0_i32_4 : i32 to index
    %c0_7 = arith.constant 0 : index
    %c0_8 = arith.constant 0 : index
    %11 = vector.load %arg2[%10, %c0_7, %c0_8] : memref<8x8x32xf32, #tpu.memory_space<vmem>>, vector<1x8x32xf32>
    %12 = vector.shape_cast %11 : vector<1x8x32xf32> to vector<8x32xf32>
    %13 = arith.addf %9, %12 : vector<8x32xf32>
    %c1_i32 = arith.constant 1 : i32
    %14 = arith.index_cast %c1_i32 : i32 to index
    %c0_9 = arith.constant 0 : index
    %c0_10 = arith.constant 0 : index
    %15 = vector.load %arg4[%14, %c0_9, %c0_10] : memref<8x8x32xf32, #tpu.memory_space<vmem>>, vector<1x8x32xf32>
    %16 = vector.shape_cast %15 : vector<1x8x32xf32> to vector<8x32xf32>
    %17 = vector.shape_cast %13 : vector<8x32xf32> to vector<1x8x32xf32>
    tpu.vector_store %arg4[%14, %c0_9, %c0_10], %17 {strides = array<i32>} : memref<8x8x32xf32, #tpu.memory_space<vmem>>, vector<1x8x32xf32>,
    %cst_11 = arith.constant dense<0.000000e+00> : vector<8x32xf32>
    %18 = tpu.matmul %13, %3, %cst_11 {dimension_numbers = #tpu.dot_dimension_numbers<[1], [0], [0], [1], [0, 0, 1, 1], [], []>} : vector<8x32xf32>, vector<32x32xf32>, vector<8x32xf32> -> vector<8x32xf32>
    %19 = arith.index_cast %c1_i32 : i32 to index
    %c0_12 = arith.constant 0 : index
    %c0_13 = arith.constant 0 : index
    %20 = vector.load %arg2[%19, %c0_12, %c0_13] : memref<8x8x32xf32, #tpu.memory_space<vmem>>, vector<1x8x32xf32>
    %21 = vector.shape_cast %20 : vector<1x8x32xf32> to vector<8x32xf32>
    %22 = arith.addf %18, %21 : vector<8x32xf32>
    %c2_i32 = arith.constant 2 : i32
    %23 = arith.index_cast %c2_i32 : i32 to index
    %c0_14 = arith.constant 0 : index
    %c0_15 = arith.constant 0 : index
    %24 = vector.load %arg4[%23, %c0_14, %c0_15] : memref<8x8x32xf32, #tpu.memory_space<vmem>>, vector<1x8x32xf32>
    %25 = vector.shape_cast %24 : vector<1x8x32xf32> to vector<8x32xf32>
    %26 = vector.shape_cast %22 : vector<8x32xf32> to vector<1x8x32xf32>
    tpu.vector_store %arg4[%23, %c0_14, %c0_15], %26 {strides = array<i32>} : memref<8x8x32xf32, #tpu.memory_space<vmem>>, vector<1x8x32xf32>,
    %cst_16 = arith.constant dense<0.000000e+00> : vector<8x32xf32>
    %27 = tpu.matmul %22, %3, %cst_16 {dimension_numbers = #tpu.dot_dimension_numbers<[1], [0], [0], [1], [0, 0, 1, 1], [], []>} : vector<8x32xf32>, vector<32x32xf32>, vector<8x32xf32> -> vector<8x32xf32>
    %28 = arith.index_cast %c2_i32 : i32 to index
    %c0_17 = arith.constant 0 : index
    %c0_18 = arith.constant 0 : index
    %29 = vector.load %arg2[%28, %c0_17, %c0_18] : memref<8x8x32xf32, #tpu.memory_space<vmem>>, vector<1x8x32xf32>
    %30 = vector.shape_cast %29 : vector<1x8x32xf32> to vector<8x32xf32>
    %31 = arith.addf %27, %30 : vector<8x32xf32>
    %c3_i32 = arith.constant 3 : i32
    %32 = arith.index_cast %c3_i32 : i32 to index
    %c0_19 = arith.constant 0 : index
    %c0_20 = arith.constant 0 : index
    %33 = vector.load %arg4[%32, %c0_19, %c0_20] : memref<8x8x32xf32, #tpu.memory_space<vmem>>, vector<1x8x32xf32>
    %34 = vector.shape_cast %33 : vector<1x8x32xf32> to vector<8x32xf32>
    %35 = vector.shape_cast %31 : vector<8x32xf32> to vector<1x8x32xf32>
    tpu.vector_store %arg4[%32, %c0_19, %c0_20], %35 {strides = array<i32>} : memref<8x8x32xf32, #tpu.memory_space<vmem>>, vector<1x8x32xf32>,
    %cst_21 = arith.constant dense<0.000000e+00> : vector<8x32xf32>
    %36 = tpu.matmul %31, %3, %cst_21 {dimension_numbers = #tpu.dot_dimension_numbers<[1], [0], [0], [1], [0, 0, 1, 1], [], []>} : vector<8x32xf32>, vector<32x32xf32>, vector<8x32xf32> -> vector<8x32xf32>
    %37 = arith.index_cast %c3_i32 : i32 to index
    %c0_22 = arith.constant 0 : index
    %c0_23 = arith.constant 0 : index
    %38 = vector.load %arg2[%37, %c0_22, %c0_23] : memref<8x8x32xf32, #tpu.memory_space<vmem>>, vector<1x8x32xf32>
    %39 = vector.shape_cast %38 : vector<1x8x32xf32> to vector<8x32xf32>
    %40 = arith.addf %36, %39 : vector<8x32xf32>
    %c4_i32 = arith.constant 4 : i32
    %41 = arith.index_cast %c4_i32 : i32 to index
    %c0_24 = arith.constant 0 : index
    %c0_25 = arith.constant 0 : index
    %42 = vector.load %arg4[%41, %c0_24, %c0_25] : memref<8x8x32xf32, #tpu.memory_space<vmem>>, vector<1x8x32xf32>
    %43 = vector.shape_cast %42 : vector<1x8x32xf32> to vector<8x32xf32>
    %44 = vector.shape_cast %40 : vector<8x32xf32> to vector<1x8x32xf32>
    tpu.vector_store %arg4[%41, %c0_24, %c0_25], %44 {strides = array<i32>} : memref<8x8x32xf32, #tpu.memory_space<vmem>>, vector<1x8x32xf32>,
    %cst_26 = arith.constant dense<0.000000e+00> : vector<8x32xf32>
    %45 = tpu.matmul %40, %3, %cst_26 {dimension_numbers = #tpu.dot_dimension_numbers<[1], [0], [0], [1], [0, 0, 1, 1], [], []>} : vector<8x32xf32>, vector<32x32xf32>, vector<8x32xf32> -> vector<8x32xf32>
    %46 = arith.index_cast %c4_i32 : i32 to index
    %c0_27 = arith.constant 0 : index
    %c0_28 = arith.constant 0 : index
    %47 = vector.load %arg2[%46, %c0_27, %c0_28] : memref<8x8x32xf32, #tpu.memory_space<vmem>>, vector<1x8x32xf32>
    %48 = vector.shape_cast %47 : vector<1x8x32xf32> to vector<8x32xf32>
    %49 = arith.addf %45, %48 : vector<8x32xf32>
    %c5_i32 = arith.constant 5 : i32
    %50 = arith.index_cast %c5_i32 : i32 to index
    %c0_29 = arith.constant 0 : index
    %c0_30 = arith.constant 0 : index
    %51 = vector.load %arg4[%50, %c0_29, %c0_30] : memref<8x8x32xf32, #tpu.memory_space<vmem>>, vector<1x8x32xf32>
    %52 = vector.shape_cast %51 : vector<1x8x32xf32> to vector<8x32xf32>
    %53 = vector.shape_cast %49 : vector<8x32xf32> to vector<1x8x32xf32>
    tpu.vector_store %arg4[%50, %c0_29, %c0_30], %53 {strides = array<i32>} : memref<8x8x32xf32, #tpu.memory_space<vmem>>, vector<1x8x32xf32>,
    %cst_31 = arith.constant dense<0.000000e+00> : vector<8x32xf32>
    %54 = tpu.matmul %49, %3, %cst_31 {dimension_numbers = #tpu.dot_dimension_numbers<[1], [0], [0], [1], [0, 0, 1, 1], [], []>} : vector<8x32xf32>, vector<32x32xf32>, vector<8x32xf32> -> vector<8x32xf32>
    %55 = arith.index_cast %c5_i32 : i32 to index
    %c0_32 = arith.constant 0 : index
    %c0_33 = arith.constant 0 : index
    %56 = vector.load %arg2[%55, %c0_32, %c0_33] : memref<8x8x32xf32, #tpu.memory_space<vmem>>, vector<1x8x32xf32>
    %57 = vector.shape_cast %56 : vector<1x8x32xf32> to vector<8x32xf32>
    %58 = arith.addf %54, %57 : vector<8x32xf32>
    %c6_i32 = arith.constant 6 : i32
    %59 = arith.index_cast %c6_i32 : i32 to index
    %c0_34 = arith.constant 0 : index
    %c0_35 = arith.constant 0 : index
    %60 = vector.load %arg4[%59, %c0_34, %c0_35] : memref<8x8x32xf32, #tpu.memory_space<vmem>>, vector<1x8x32xf32>
    %61 = vector.shape_cast %60 : vector<1x8x32xf32> to vector<8x32xf32>
    %62 = vector.shape_cast %58 : vector<8x32xf32> to vector<1x8x32xf32>
    tpu.vector_store %arg4[%59, %c0_34, %c0_35], %62 {strides = array<i32>} : memref<8x8x32xf32, #tpu.memory_space<vmem>>, vector<1x8x32xf32>,
    %cst_36 = arith.constant dense<0.000000e+00> : vector<8x32xf32>
    %63 = tpu.matmul %58, %3, %cst_36 {dimension_numbers = #tpu.dot_dimension_numbers<[1], [0], [0], [1], [0, 0, 1, 1], [], []>} : vector<8x32xf32>, vector<32x32xf32>, vector<8x32xf32> -> vector<8x32xf32>
    %64 = arith.index_cast %c6_i32 : i32 to index
    %c0_37 = arith.constant 0 : index
    %c0_38 = arith.constant 0 : index
    %65 = vector.load %arg2[%64, %c0_37, %c0_38] : memref<8x8x32xf32, #tpu.memory_space<vmem>>, vector<1x8x32xf32>
    %66 = vector.shape_cast %65 : vector<1x8x32xf32> to vector<8x32xf32>
    %67 = arith.addf %63, %66 : vector<8x32xf32>
    %c7_i32 = arith.constant 7 : i32
    %68 = arith.index_cast %c7_i32 : i32 to index
    %c0_39 = arith.constant 0 : index
    %c0_40 = arith.constant 0 : index
    %69 = vector.load %arg4[%68, %c0_39, %c0_40] : memref<8x8x32xf32, #tpu.memory_space<vmem>>, vector<1x8x32xf32>
    %70 = vector.shape_cast %69 : vector<1x8x32xf32> to vector<8x32xf32>
    %71 = vector.shape_cast %67 : vector<8x32xf32> to vector<1x8x32xf32>
    tpu.vector_store %arg4[%68, %c0_39, %c0_40], %71 {strides = array<i32>} : memref<8x8x32xf32, #tpu.memory_space<vmem>>, vector<1x8x32xf32>,
    %cst_41 = arith.constant dense<0.000000e+00> : vector<8x32xf32>
    %72 = tpu.matmul %67, %3, %cst_41 {dimension_numbers = #tpu.dot_dimension_numbers<[1], [0], [0], [1], [0, 0, 1, 1], [], []>} : vector<8x32xf32>, vector<32x32xf32>, vector<8x32xf32> -> vector<8x32xf32>
    %73 = arith.index_cast %c7_i32 : i32 to index
    %c0_42 = arith.constant 0 : index
    %c0_43 = arith.constant 0 : index
    %74 = vector.load %arg2[%73, %c0_42, %c0_43] : memref<8x8x32xf32, #tpu.memory_space<vmem>>, vector<1x8x32xf32>
    %75 = vector.shape_cast %74 : vector<1x8x32xf32> to vector<8x32xf32>
    %76 = arith.addf %72, %75 : vector<8x32xf32>
    %c8_i32 = arith.constant 8 : i32
    %c0_44 = arith.constant 0 : index
    %c0_45 = arith.constant 0 : index
    %77 = vector.load %arg5[%c0_44, %c0_45] : memref<8x32xf32, #tpu.memory_space<vmem>>, vector<8x32xf32>
    tpu.vector_store %arg5[%c0_44, %c0_45], %76 {strides = array<i32>} : memref<8x32xf32, #tpu.memory_space<vmem>>, vector<8x32xf32>,
    return
  }
  func.func @transform_0(%arg0: i32, %arg1: i32) -> (i32, i32, i32) {
    %c0_i32 = arith.constant 0 : i32
    %c0_i32_0 = arith.constant 0 : i32
    return %arg1, %arg0, %c0_i32 : i32, i32, i32
  }
  func.func @transform_1(%arg0: i32, %arg1: i32) -> (i32, i32) {
    %c0_i32 = arith.constant 0 : i32
    %c0_i32_0 = arith.constant 0 : i32
    %c0_i32_1 = arith.constant 0 : i32
    return %c0_i32, %c0_i32_0 : i32, i32
  }
  func.func @transform_2(%arg0: i32, %arg1: i32) -> (i32, i32, i32) {
    %c0_i32 = arith.constant 0 : i32
    %c0_i32_0 = arith.constant 0 : i32
    return %arg1, %arg0, %c0_i32 : i32, i32, i32
  }
}

</mosaic_0001>

<llo_original>
// kernel: custom_rnn_forward.3
$region0: #{custom_rnn_forward.3}
  #allocation0 [shape = 'u32[]', space=smem, size = 0x4, offset = 0x4, fixed_abs, tag = 'smem constant byte address 0x4 - core index']
  #allocation1 [shape = 'u32[144,128]{1,0:T(1,128)}', space=vmem, size = 0x12000, scoped, tag = 'internal scratch']
  %s0 = inlined_call_operand.vmem [shape: f32[64,32], index: 0, kind: input, shape index: {}]
  %s1 = inlined_call_operand.vmem [shape: f32[32,64], index: 1, kind: input, shape index: {}]
  %s2 = inlined_call_operand.vmem [shape: f32[1,64], index: 2, kind: input, shape index: {}]
  %s3 = inlined_call_operand.vmem [shape: f32[64,12], index: 3, kind: input, shape index: {}]
  %s4 = inlined_call_operand.vmem [shape: f32[1,12], index: 4, kind: input, shape index: {}]
  %s5 = inlined_call_operand.vmem [shape: f32[64,12], index: 5, kind: output, shape index: {}]
  %s6 = sld [smem:[#allocation0]]
  $region30: #{custom_rnn_forward.3} parent=0
    _
  %s8 = ssub.s32 1, %s6
  %s9 = scalar_select 0, %s8, %s6
  // Predicated region
  $region2: #{custom_rnn_forward.3} parent=0 // pred_check
    _
  $region3: #{custom_rnn_forward.3} parent=0 // pred_check_branch
    %11 = sbr.rel (0) target = $region5
  $region4: #{custom_rnn_forward.3} parent=0 // pred_region
    _
  $region5: #{custom_rnn_forward.3} parent=0 // pred_fallthru
    _
  // Predicated region
  $region6: #{custom_rnn_forward.3} parent=0 // pred_check
    _
  $region7: #{custom_rnn_forward.3} parent=0 // pred_check_branch
    %13 = sbr.rel (0) target = $region9
  $region8: #{custom_rnn_forward.3} parent=0 // pred_region
    _
  $region9: #{custom_rnn_forward.3} parent=0 // pred_fallthru
    _
  // Predicated region
  $region10: #{custom_rnn_forward.3} parent=0 // pred_check
    _
  $region11: #{custom_rnn_forward.3} parent=0 // pred_check_branch
    %15 = sbr.rel (0) target = $region13
  $region12: #{custom_rnn_forward.3} parent=0 // pred_region
    _
  $region13: #{custom_rnn_forward.3} parent=0 // pred_fallthru
    _
  // Predicated region
  $region14: #{custom_rnn_forward.3} parent=0 // pred_check
    _
  $region15: #{custom_rnn_forward.3} parent=0 // pred_check_branch
    %17 = sbr.rel (0) target = $region17
  $region16: #{custom_rnn_forward.3} parent=0 // pred_region
    _
  $region17: #{custom_rnn_forward.3} parent=0 // pred_fallthru
    _
  // Predicated region
  $region18: #{custom_rnn_forward.3} parent=0 // pred_check
    _
  $region19: #{custom_rnn_forward.3} parent=0 // pred_check_branch
    %19 = sbr.rel (0) target = $region21
  $region20: #{custom_rnn_forward.3} parent=0 // pred_region
    _
  $region21: #{custom_rnn_forward.3} parent=0 // pred_fallthru
    _
  %v20 = vld [vmem:[%s0] sm:$0xff]
  %v21 = vld [vmem:[%s0 + $0x8] sm:$0xff]
  %v22 = vld [vmem:[%s0 + $0x10] sm:$0xff]
  %v23 = vld [vmem:[%s0 + $0x18] sm:$0xff]
  %v24 = vld [vmem:[%s0 + $0x20] sm:$0xff]
  %v25 = vld [vmem:[%s0 + $0x28] sm:$0xff]
  %v26 = vld [vmem:[%s0 + $0x30] sm:$0xff]
  %v27 = vld [vmem:[%s0 + $0x38] sm:$0xff]
  %v28 = vld [vmem:[%s1] sm:$0xff]
  %v29 = vld [vmem:[%s1 + $0x8] sm:$0xff]
  %v30 = vld [vmem:[%s1 + $0x10] sm:$0xff]
  %v31 = vld [vmem:[%s1 + $0x18] sm:$0xff]
  %v32 = vld [vmem:[%s2] sm:$0x1]
  %v34 = vlaneseq
  %v35 = vshrl.u32 %v34, 7
  %v36 = vsub.s32 0, %v35
  %v37 = vrot.slane %v32, %v36
  %vm39 = vcmask 261120
  %v41 = vsel %vm39, %v20, 0
  %v44 = vsel %vm39, %v21, 0
  %v47 = vsel %vm39, %v22, 0
  %v50 = vsel %vm39, %v23, 0
  %v53 = vsel %vm39, %v24, 0
  %v56 = vsel %vm39, %v25, 0
  %v59 = vsel %vm39, %v26, 0
  %v62 = vsel %vm39, %v27, 0
  %64 = vmatprep.subr.mxu0 0.0
  %65 = vmatpush1.msra.mxu0 %v28
  %66 = vmatprep.subr.mxu0 0.0
  %67 = vmatpush1.msra.mxu0 %v29
  %68 = vmatprep.subr.mxu0 0.0
  %69 = vmatpush1.msra.mxu0 %v30
  %70 = vmatprep.subr.mxu0 0.0
  %71 = vmatpush1.msra.mxu0 %v31
  %72 = vmatprep.subr.mxu0 0.0
  %73 = vmatpush1.msra.mxu0 0.0
  %74 = vmatprep.subr.mxu0 0.0
  %75 = vmatpush1.msra.mxu0 0.0
  %76 = vmatprep.subr.mxu0 0.0
  %77 = vmatpush1.msra.mxu0 0.0
  %78 = vmatprep.subr.mxu0 0.0
  %79 = vmatpush1.msra.mxu0 0.0
  %80 = vmatprep.subr.mxu0 0.0
  %81 = vmatpush1.msra.mxu0 0.0
  %82 = vmatprep.subr.mxu0 0.0
  %83 = vmatpush1.msra.mxu0 0.0
  %84 = vmatprep.subr.mxu0 0.0
  %85 = vmatpush1.msra.mxu0 0.0
  %86 = vmatprep.subr.mxu0 0.0
  %87 = vmatpush1.msra.mxu0 0.0
  %88 = vmatprep.subr.mxu0 0.0
  %89 = vmatpush1.msra.mxu0 0.0
  %90 = vmatprep.subr.mxu0 0.0
  %91 = vmatpush1.msra.mxu0 0.0
  %92 = vmatprep.subr.mxu0 0.0
  %93 = vmatpush1.msra.mxu0 0.0
  %94 = vmatprep.subr.mxu0 0.0
  %95 = vmatpush1.msra.mxu0 0.0
  %96 = vmatprep.subr.mxu0 0.0
  %97 = vmatpush1.msra.mxu0 0.0
  %98 = vmatprep.subr.mxu0 0.0
  %99 = vmatpush1.msra.mxu0 0.0
  %100 = vmatprep.subr.mxu0 0.0
  %101 = vmatpush1.msra.mxu0 0.0
  %102 = vmatprep.subr.mxu0 0.0
  %103 = vmatpush1.msra.mxu0 0.0
  %104 = vmatprep.subr.mxu0 0.0
  %105 = vmatpush1.msra.mxu0 0.0
  %106 = vmatprep.subr.mxu0 0.0
  %107 = vmatpush1.msra.mxu0 0.0
  %108 = vmatprep.subr.mxu0 0.0
  %109 = vmatpush1.msra.mxu0 0.0
  %110 = vmatprep.subr.mxu0 0.0
  %111 = vmatpush1.msra.mxu0 0.0
  %112 = vmatprep.subr.mxu0 0.0
  %113 = vmatpush1.msra.mxu0 0.0
  %114 = vmatprep.subr.mxu0 0.0
  %115 = vmatpush1.msra.mxu0 0.0
  %116 = vmatprep.subr.mxu0 0.0
  %117 = vmatpush1.msra.mxu0 0.0
  %118 = vmatprep.subr.mxu0 0.0
  %119 = vmatpush1.msra.mxu0 0.0
  %120 = vmatprep.subr.mxu0 0.0
  %121 = vmatpush1.msra.mxu0 0.0
  %122 = vmatprep.subr.mxu0 0.0
  %123 = vmatpush1.msra.mxu0 0.0
  %124 = vmatprep.subr.mxu0 0.0
  %125 = vmatpush1.msra.mxu0 0.0
  %126 = vmatprep.subr.mxu0 0.0
  %127 = vmatpush1.msra.mxu0 0.0
  %128 = vmatprep.mubr.f32.mxu0 0.0
  %129 = vmatmul.mubr.f32.gmra.mrb[0].mxu0 %v41
  %v130 = vpop.f32.mrb[0].mxu0
  %v131 = vadd.f32 %v37, %v130
  %v132 = vpop.f32.mrb[0].mxu0
  %133 = vmatprep.mubr.f32.mxu0 0.0
  %134 = vmatmul.mubr.f32.gmra.mrb[0].mxu0 %v44
  %v135 = vpop.f32.mrb[0].mxu0
  %v136 = vadd.f32 %v37, %v135
  %v137 = vpop.f32.mrb[0].mxu0
  %138 = vmatprep.mubr.f32.mxu0 0.0
  %139 = vmatmul.mubr.f32.gmra.mrb[0].mxu0 %v47
  %v140 = vpop.f32.mrb[0].mxu0
  %v141 = vadd.f32 %v37, %v140
  %v142 = vpop.f32.mrb[0].mxu0
  %143 = vmatprep.mubr.f32.mxu0 0.0
  %144 = vmatmul.mubr.f32.gmra.mrb[0].mxu0 %v50
  %v145 = vpop.f32.mrb[0].mxu0
  %v146 = vadd.f32 %v37, %v145
  %v147 = vpop.f32.mrb[0].mxu0
  %148 = vmatprep.mubr.f32.mxu0 0.0
  %149 = vmatmul.mubr.f32.gmra.mrb[0].mxu0 %v53
  %v150 = vpop.f32.mrb[0].mxu0
  %v151 = vadd.f32 %v37, %v150
  %v152 = vpop.f32.mrb[0].mxu0
  %153 = vmatprep.mubr.f32.mxu0 0.0
  %154 = vmatmul.mubr.f32.gmra.mrb[0].mxu0 %v56
  %v155 = vpop.f32.mrb[0].mxu0
  %v156 = vadd.f32 %v37, %v155
  %v157 = vpop.f32.mrb[0].mxu0
  %158 = vmatprep.mubr.f32.mxu0 0.0
  %159 = vmatmul.mubr.f32.gmra.mrb[0].mxu0 %v59
  %v160 = vpop.f32.mrb[0].mxu0
  %v161 = vadd.f32 %v37, %v160
  %v162 = vpop.f32.mrb[0].mxu0
  %163 = vmatprep.mubr.f32.mxu0 0.0
  %164 = vmatmul.mubr.f32.gmra.mrb[0].mxu0 %v62
  %v165 = vpop.f32.mrb[0].mxu0
  %v166 = vadd.f32 %v37, %v165
  %v167 = vpop.f32.mrb[0].mxu0
  %168 = vdwg.mxu0
  %v169 = vmax.f32 %v131, 0.0
  %v170 = vmax.f32 %v136, 0.0
  %v171 = vmax.f32 %v141, 0.0
  %v172 = vmax.f32 %v146, 0.0
  %v173 = vmax.f32 %v151, 0.0
  %v174 = vmax.f32 %v156, 0.0
  %v175 = vmax.f32 %v161, 0.0
  %v176 = vmax.f32 %v166, 0.0
  %v177 = vld [vmem:[%s3] sm:$0xff]
  %v178 = vld [vmem:[%s3 + $0x8] sm:$0xff]
  %v179 = vld [vmem:[%s3 + $0x10] sm:$0xff]
  %v180 = vld [vmem:[%s3 + $0x18] sm:$0xff]
  %v181 = vld [vmem:[%s3 + $0x20] sm:$0xff]
  %v182 = vld [vmem:[%s3 + $0x28] sm:$0xff]
  %v183 = vld [vmem:[%s3 + $0x30] sm:$0xff]
  %v184 = vld [vmem:[%s3 + $0x38] sm:$0xff]
  %v185 = vld [vmem:[%s4] sm:$0x1]
  %v187 = vlaneseq
  %v188 = vshrl.u32 %v187, 7
  %v189 = vsub.s32 0, %v188
  %v190 = vrot.slane %v185, %v189
  %vm192 = vcmask 523264
  %v194 = vsel %vm192, %v169, 0
  %v197 = vsel %vm192, %v170, 0
  %v200 = vsel %vm192, %v171, 0
  %v203 = vsel %vm192, %v172, 0
  %v206 = vsel %vm192, %v173, 0
  %v209 = vsel %vm192, %v174, 0
  %v212 = vsel %vm192, %v175, 0
  %v215 = vsel %vm192, %v176, 0
  %217 = vmatprep.subr.mxu0 0.0
  %218 = vmatpush1.msra.mxu0 %v177
  %219 = vmatprep.subr.mxu0 0.0
  %220 = vmatpush1.msra.mxu0 %v178
  %221 = vmatprep.subr.mxu0 0.0
  %222 = vmatpush1.msra.mxu0 %v179
  %223 = vmatprep.subr.mxu0 0.0
  %224 = vmatpush1.msra.mxu0 %v180
  %225 = vmatprep.subr.mxu0 0.0
  %226 = vmatpush1.msra.mxu0 %v181
  %227 = vmatprep.subr.mxu0 0.0
  %228 = vmatpush1.msra.mxu0 %v182
  %229 = vmatprep.subr.mxu0 0.0
  %230 = vmatpush1.msra.mxu0 %v183
  %231 = vmatprep.subr.mxu0 0.0
  %232 = vmatpush1.msra.mxu0 %v184
  %233 = vmatprep.subr.mxu0 0.0
  %234 = vmatpush1.msra.mxu0 0.0
  %235 = vmatprep.subr.mxu0 0.0
  %236 = vmatpush1.msra.mxu0 0.0
  %237 = vmatprep.subr.mxu0 0.0
  %238 = vmatpush1.msra.mxu0 0.0
  %239 = vmatprep.subr.mxu0 0.0
  %240 = vmatpush1.msra.mxu0 0.0
  %241 = vmatprep.subr.mxu0 0.0
  %242 = vmatpush1.msra.mxu0 0.0
  %243 = vmatprep.subr.mxu0 0.0
  %244 = vmatpush1.msra.mxu0 0.0
  %245 = vmatprep.subr.mxu0 0.0
  %246 = vmatpush1.msra.mxu0 0.0
  %247 = vmatprep.subr.mxu0 0.0
  %248 = vmatpush1.msra.mxu0 0.0
  %249 = vmatprep.subr.mxu0 0.0
  %250 = vmatpush1.msra.mxu0 0.0
  %251 = vmatprep.subr.mxu0 0.0
  %252 = vmatpush1.msra.mxu0 0.0
  %253 = vmatprep.subr.mxu0 0.0
  %254 = vmatpush1.msra.mxu0 0.0
  %255 = vmatprep.subr.mxu0 0.0
  %256 = vmatpush1.msra.mxu0 0.0
  %257 = vmatprep.subr.mxu0 0.0
  %258 = vmatpush1.msra.mxu0 0.0
  %259 = vmatprep.subr.mxu0 0.0
  %260 = vmatpush1.msra.mxu0 0.0
  %261 = vmatprep.subr.mxu0 0.0
  %262 = vmatpush1.msra.mxu0 0.0
  %263 = vmatprep.subr.mxu0 0.0
  %264 = vmatpush1.msra.mxu0 0.0
  %265 = vmatprep.subr.mxu0 0.0
  %266 = vmatpush1.msra.mxu0 0.0
  %267 = vmatprep.subr.mxu0 0.0
  %268 = vmatpush1.msra.mxu0 0.0
  %269 = vmatprep.subr.mxu0 0.0
  %270 = vmatpush1.msra.mxu0 0.0
  %271 = vmatprep.subr.mxu0 0.0
  %272 = vmatpush1.msra.mxu0 0.0
  %273 = vmatprep.subr.mxu0 0.0
  %274 = vmatpush1.msra.mxu0 0.0
  %275 = vmatprep.subr.mxu0 0.0
  %276 = vmatpush1.msra.mxu0 0.0
  %277 = vmatprep.subr.mxu0 0.0
  %278 = vmatpush1.msra.mxu0 0.0
  %279 = vmatprep.subr.mxu0 0.0
  %280 = vmatpush1.msra.mxu0 0.0
  %281 = vmatprep.mubr.f32.mxu0 0.0
  %282 = vmatmul.mubr.f32.gmra.mrb[0].mxu0 %v194
  %v283 = vpop.f32.mrb[0].mxu0
  %v284 = vadd.f32 %v190, %v283
  %v285 = vpop.f32.mrb[0].mxu0
  %286 = vmatprep.mubr.f32.mxu0 0.0
  %287 = vmatmul.mubr.f32.gmra.mrb[0].mxu0 %v197
  %v288 = vpop.f32.mrb[0].mxu0
  %v289 = vadd.f32 %v190, %v288
  %v290 = vpop.f32.mrb[0].mxu0
  %291 = vmatprep.mubr.f32.mxu0 0.0
  %292 = vmatmul.mubr.f32.gmra.mrb[0].mxu0 %v200
  %v293 = vpop.f32.mrb[0].mxu0
  %v294 = vadd.f32 %v190, %v293
  %v295 = vpop.f32.mrb[0].mxu0
  %296 = vmatprep.mubr.f32.mxu0 0.0
  %297 = vmatmul.mubr.f32.gmra.mrb[0].mxu0 %v203
  %v298 = vpop.f32.mrb[0].mxu0
  %v299 = vadd.f32 %v190, %v298
  %v300 = vpop.f32.mrb[0].mxu0
  %301 = vmatprep.mubr.f32.mxu0 0.0
  %302 = vmatmul.mubr.f32.gmra.mrb[0].mxu0 %v206
  %v303 = vpop.f32.mrb[0].mxu0
  %v304 = vadd.f32 %v190, %v303
  %v305 = vpop.f32.mrb[0].mxu0
  %306 = vmatprep.mubr.f32.mxu0 0.0
  %307 = vmatmul.mubr.f32.gmra.mrb[0].mxu0 %v209
  %v308 = vpop.f32.mrb[0].mxu0
  %v309 = vadd.f32 %v190, %v308
  %v310 = vpop.f32.mrb[0].mxu0
  %311 = vmatprep.mubr.f32.mxu0 0.0
  %312 = vmatmul.mubr.f32.gmra.mrb[0].mxu0 %v212
  %v313 = vpop.f32.mrb[0].mxu0
  %v314 = vadd.f32 %v190, %v313
  %v315 = vpop.f32.mrb[0].mxu0
  %316 = vmatprep.mubr.f32.mxu0 0.0
  %317 = vmatmul.mubr.f32.gmra.mrb[0].mxu0 %v215
  %v318 = vpop.f32.mrb[0].mxu0
  %v319 = vadd.f32 %v190, %v318
  %v320 = vpop.f32.mrb[0].mxu0
  %321 = vdwg.mxu0
  %v322 = vxor.u32 %v284, 2147483648
  %v323 = vxor.u32 %v289, 2147483648
  %v324 = vxor.u32 %v294, 2147483648
  %v325 = vxor.u32 %v299, 2147483648
  %v326 = vxor.u32 %v304, 2147483648
  %v327 = vxor.u32 %v309, 2147483648
  %v328 = vxor.u32 %v314, 2147483648
  %v329 = vxor.u32 %v319, 2147483648
  %v330 = vmul.f32 %v322, 1.442695
  %v331 = vpow.pop %v330
  %v332 = vmul.f32 %v323, 1.442695
  %v333 = vpow.pop %v332
  %v334 = vmul.f32 %v324, 1.442695
  %v335 = vpow.pop %v334
  %v336 = vmul.f32 %v325, 1.442695
  %v337 = vpow.pop %v336
  %v338 = vmul.f32 %v326, 1.442695
  %v339 = vpow.pop %v338
  %v340 = vmul.f32 %v327, 1.442695
  %v341 = vpow.pop %v340
  %v342 = vmul.f32 %v328, 1.442695
  %v343 = vpow.pop %v342
  %v344 = vmul.f32 %v329, 1.442695
  %v345 = vpow.pop %v344
  %v346 = vadd.f32 %v331, 1.0
  %v347 = vadd.f32 %v333, 1.0
  %v348 = vadd.f32 %v335, 1.0
  %v349 = vadd.f32 %v337, 1.0
  %v350 = vadd.f32 %v339, 1.0
  %v351 = vadd.f32 %v341, 1.0
  %v352 = vadd.f32 %v343, 1.0
  %v353 = vadd.f32 %v345, 1.0
  %v354 = vrcp.pop %v346
  %v355 = vmul.f32 1.0, %v354
  %v356 = vrcp.pop %v347
  %v357 = vmul.f32 1.0, %v356
  %v358 = vrcp.pop %v348
  %v359 = vmul.f32 1.0, %v358
  %v360 = vrcp.pop %v349
  %v361 = vmul.f32 1.0, %v360
  %v362 = vrcp.pop %v350
  %v363 = vmul.f32 1.0, %v362
  %v364 = vrcp.pop %v351
  %v365 = vmul.f32 1.0, %v364
  %v366 = vrcp.pop %v352
  %v367 = vmul.f32 1.0, %v366
  %v368 = vrcp.pop %v353
  %v369 = vmul.f32 1.0, %v368
  %vm370 = vcmask 97280
  %371 = vst.msk [vmem:[%s5] sm:$0xff] %vm370, %v355
  %372 = vst.msk [vmem:[%s5 + $0x8] sm:$0xff] %vm370, %v357
  %373 = vst.msk [vmem:[%s5 + $0x10] sm:$0xff] %vm370, %v359
  %374 = vst.msk [vmem:[%s5 + $0x18] sm:$0xff] %vm370, %v361
  %375 = vst.msk [vmem:[%s5 + $0x20] sm:$0xff] %vm370, %v363
  %376 = vst.msk [vmem:[%s5 + $0x28] sm:$0xff] %vm370, %v365
  %377 = vst.msk [vmem:[%s5 + $0x30] sm:$0xff] %vm370, %v367
  %378 = vst.msk [vmem:[%s5 + $0x38] sm:$0xff] %vm370, %v369
  // Predicated region
  $region22: #{custom_rnn_forward.3} parent=0 // pred_check
    _
  $region23: #{custom_rnn_forward.3} parent=0 // pred_check_branch
    %380 = sbr.rel (0) target = $region25
  $region24: #{custom_rnn_forward.3} parent=0 // pred_region
    _
  $region25: #{custom_rnn_forward.3} parent=0 // pred_fallthru
    _
  // Predicated region
  $region26: #{custom_rnn_forward.3} parent=0 // pred_check
    _
  $region27: #{custom_rnn_forward.3} parent=0 // pred_check_branch
    %382 = sbr.rel (0) target = $region29
  $region28: #{custom_rnn_forward.3} parent=0 // pred_region
    _
  $region29: #{custom_rnn_forward.3} parent=0 // pred_fallthru
    _

// kernel: custom_rnn_forward.2
$region0: #{custom_rnn_forward.2}
  #allocation0 [shape = 'u32[]', space=smem, size = 0x4, offset = 0x4, fixed_abs, tag = 'smem constant byte address 0x4 - core index']
  #allocation1 [shape = 'u32[144,128]{1,0:T(1,128)}', space=vmem, size = 0x12000, scoped, tag = 'internal scratch']
  #allocation2 [shape = 'f32[8,32]{1,0:T(8,128)}', space=vmem, size = 0x1000, scoped, tag = 'scratch operand']
  %s0 = inlined_call_operand.vmem [shape: f32[8,8,32], index: 0, kind: input, shape index: {}]
  %s1 = inlined_call_operand.vmem [shape: f32[32,32], index: 1, kind: input, shape index: {}]
  %s2 = inlined_call_operand.vmem [shape: f32[8,8,32], index: 2, kind: output, shape index: {}]
  %s3 = sld [smem:[#allocation0]]
  $region22: #{custom_rnn_forward.2} parent=0
    _
  %s5 = ssub.s32 1, %s3
  %s6 = scalar_select 0, %s5, %s3
  // Predicated region
  $region2: #{custom_rnn_forward.2} parent=0 // pred_check
    _
  $region3: #{custom_rnn_forward.2} parent=0 // pred_check_branch
    %8 = sbr.rel (0) target = $region5
  $region4: #{custom_rnn_forward.2} parent=0 // pred_region
    _
  $region5: #{custom_rnn_forward.2} parent=0 // pred_fallthru
    _
  // Predicated region
  $region6: #{custom_rnn_forward.2} parent=0 // pred_check
    _
  $region7: #{custom_rnn_forward.2} parent=0 // pred_check_branch
    %10 = sbr.rel (0) target = $region9
  $region8: #{custom_rnn_forward.2} parent=0 // pred_region
    _
  $region9: #{custom_rnn_forward.2} parent=0 // pred_fallthru
    _
  %p11 = scmp.eq.s32.totalorder 0, 0
  // Predicated region
  $region10: #{custom_rnn_forward.2} parent=0 // pred_check
    %p12 = pneg %p11
  $region11: #{custom_rnn_forward.2} parent=0 // pred_check_branch
    %14 = sbr.rel (%p12) target = $region13
  $region12: #{custom_rnn_forward.2} parent=0 // pred_region
    %vm15 = vcmask 261120
    %16 = vst.msk [vmem:[#allocation2] sm:$0xff] %vm15, 0.0
  $region13: #{custom_rnn_forward.2} parent=0 // pred_fallthru
    _
  %v17 = vld [vmem:[%s1] sm:$0xff]
  %v18 = vld [vmem:[%s1 + $0x8] sm:$0xff]
  %v19 = vld [vmem:[%s1 + $0x10] sm:$0xff]
  %v20 = vld [vmem:[%s1 + $0x18] sm:$0xff]
  %v21 = vld [vmem:[#allocation2] sm:$0xff]
  %vm22 = vcmask 261120
  %23 = vst.msk [vmem:[%s2] sm:$0xff] %vm22, %v21
  %v24 = vld [vmem:[%s0] sm:$0xff]
  %v26 = vsel %vm22, %v21, 0
  %28 = vmatprep.subr.mxu0 0.0
  %29 = vmatpush1.msra.mxu0 %v17
  %30 = vmatprep.subr.mxu0 0.0
  %31 = vmatpush1.msra.mxu0 %v18
  %32 = vmatprep.subr.mxu0 0.0
  %33 = vmatpush1.msra.mxu0 %v19
  %34 = vmatprep.subr.mxu0 0.0
  %35 = vmatpush1.msra.mxu0 %v20
  %36 = vmatprep.subr.mxu0 0.0
  %37 = vmatpush1.msra.mxu0 0.0
  %38 = vmatprep.subr.mxu0 0.0
  %39 = vmatpush1.msra.mxu0 0.0
  %40 = vmatprep.subr.mxu0 0.0
  %41 = vmatpush1.msra.mxu0 0.0
  %42 = vmatprep.subr.mxu0 0.0
  %43 = vmatpush1.msra.mxu0 0.0
  %44 = vmatprep.subr.mxu0 0.0
  %45 = vmatpush1.msra.mxu0 0.0
  %46 = vmatprep.subr.mxu0 0.0
  %47 = vmatpush1.msra.mxu0 0.0
  %48 = vmatprep.subr.mxu0 0.0
  %49 = vmatpush1.msra.mxu0 0.0
  %50 = vmatprep.subr.mxu0 0.0
  %51 = vmatpush1.msra.mxu0 0.0
  %52 = vmatprep.subr.mxu0 0.0
  %53 = vmatpush1.msra.mxu0 0.0
  %54 = vmatprep.subr.mxu0 0.0
  %55 = vmatpush1.msra.mxu0 0.0
  %56 = vmatprep.subr.mxu0 0.0
  %57 = vmatpush1.msra.mxu0 0.0
  %58 = vmatprep.subr.mxu0 0.0
  %59 = vmatpush1.msra.mxu0 0.0
  %60 = vmatprep.subr.mxu0 0.0
  %61 = vmatpush1.msra.mxu0 0.0
  %62 = vmatprep.subr.mxu0 0.0
  %63 = vmatpush1.msra.mxu0 0.0
  %64 = vmatprep.subr.mxu0 0.0
  %65 = vmatpush1.msra.mxu0 0.0
  %66 = vmatprep.subr.mxu0 0.0
  %67 = vmatpush1.msra.mxu0 0.0
  %68 = vmatprep.subr.mxu0 0.0
  %69 = vmatpush1.msra.mxu0 0.0
  %70 = vmatprep.subr.mxu0 0.0
  %71 = vmatpush1.msra.mxu0 0.0
  %72 = vmatprep.subr.mxu0 0.0
  %73 = vmatpush1.msra.mxu0 0.0
  %74 = vmatprep.subr.mxu0 0.0
  %75 = vmatpush1.msra.mxu0 0.0
  %76 = vmatprep.subr.mxu0 0.0
  %77 = vmatpush1.msra.mxu0 0.0
  %78 = vmatprep.subr.mxu0 0.0
  %79 = vmatpush1.msra.mxu0 0.0
  %80 = vmatprep.subr.mxu0 0.0
  %81 = vmatpush1.msra.mxu0 0.0
  %82 = vmatprep.subr.mxu0 0.0
  %83 = vmatpush1.msra.mxu0 0.0
  %84 = vmatprep.subr.mxu0 0.0
  %85 = vmatpush1.msra.mxu0 0.0
  %86 = vmatprep.subr.mxu0 0.0
  %87 = vmatpush1.msra.mxu0 0.0
  %88 = vmatprep.subr.mxu0 0.0
  %89 = vmatpush1.msra.mxu0 0.0
  %90 = vmatprep.subr.mxu0 0.0
  %91 = vmatpush1.msra.mxu0 0.0
  %92 = vmatprep.mubr.f32.mxu0 0.0
  %93 = vmatmul.mubr.f32.gmra.mrb[0].mxu0 %v26
  %v94 = vpop.f32.mrb[0].mxu0
  %v95 = vadd.f32 %v24, %v94
  %v96 = vpop.f32.mrb[0].mxu0
  %97 = vdwg.mxu0
  %s98 = scalar_lea.vmem %s2, 8
  %99 = vst.msk [vmem:[%s98] sm:$0xff] %vm22, %v95
  %s100 = scalar_lea.vmem %s0, 8
  %v101 = vld [vmem:[%s100] sm:$0xff]
  %v103 = vsel %vm22, %v95, 0
  %105 = vmatprep.subr.mxu0 0.0
  %106 = vmatpush1.msra.mxu0 %v17
  %107 = vmatprep.subr.mxu0 0.0
  %108 = vmatpush1.msra.mxu0 %v18
  %109 = vmatprep.subr.mxu0 0.0
  %110 = vmatpush1.msra.mxu0 %v19
  %111 = vmatprep.subr.mxu0 0.0
  %112 = vmatpush1.msra.mxu0 %v20
  %113 = vmatprep.subr.mxu0 0.0
  %114 = vmatpush1.msra.mxu0 0.0
  %115 = vmatprep.subr.mxu0 0.0
  %116 = vmatpush1.msra.mxu0 0.0
  %117 = vmatprep.subr.mxu0 0.0
  %118 = vmatpush1.msra.mxu0 0.0
  %119 = vmatprep.subr.mxu0 0.0
  %120 = vmatpush1.msra.mxu0 0.0
  %121 = vmatprep.subr.mxu0 0.0
  %122 = vmatpush1.msra.mxu0 0.0
  %123 = vmatprep.subr.mxu0 0.0
  %124 = vmatpush1.msra.mxu0 0.0
  %125 = vmatprep.subr.mxu0 0.0
  %126 = vmatpush1.msra.mxu0 0.0
  %127 = vmatprep.subr.mxu0 0.0
  %128 = vmatpush1.msra.mxu0 0.0
  %129 = vmatprep.subr.mxu0 0.0
  %130 = vmatpush1.msra.mxu0 0.0
  %131 = vmatprep.subr.mxu0 0.0
  %132 = vmatpush1.msra.mxu0 0.0
  %133 = vmatprep.subr.mxu0 0.0
  %134 = vmatpush1.msra.mxu0 0.0
  %135 = vmatprep.subr.mxu0 0.0
  %136 = vmatpush1.msra.mxu0 0.0
  %137 = vmatprep.subr.mxu0 0.0
  %138 = vmatpush1.msra.mxu0 0.0
  %139 = vmatprep.subr.mxu0 0.0
  %140 = vmatpush1.msra.mxu0 0.0
  %141 = vmatprep.subr.mxu0 0.0
  %142 = vmatpush1.msra.mxu0 0.0
  %143 = vmatprep.subr.mxu0 0.0
  %144 = vmatpush1.msra.mxu0 0.0
  %145 = vmatprep.subr.mxu0 0.0
  %146 = vmatpush1.msra.mxu0 0.0
  %147 = vmatprep.subr.mxu0 0.0
  %148 = vmatpush1.msra.mxu0 0.0
  %149 = vmatprep.subr.mxu0 0.0
  %150 = vmatpush1.msra.mxu0 0.0
  %151 = vmatprep.subr.mxu0 0.0
  %152 = vmatpush1.msra.mxu0 0.0
  %153 = vmatprep.subr.mxu0 0.0
  %154 = vmatpush1.msra.mxu0 0.0
  %155 = vmatprep.subr.mxu0 0.0
  %156 = vmatpush1.msra.mxu0 0.0
  %157 = vmatprep.subr.mxu0 0.0
  %158 = vmatpush1.msra.mxu0 0.0
  %159 = vmatprep.subr.mxu0 0.0
  %160 = vmatpush1.msra.mxu0 0.0
  %161 = vmatprep.subr.mxu0 0.0
  %162 = vmatpush1.msra.mxu0 0.0
  %163 = vmatprep.subr.mxu0 0.0
  %164 = vmatpush1.msra.mxu0 0.0
  %165 = vmatprep.subr.mxu0 0.0
  %166 = vmatpush1.msra.mxu0 0.0
  %167 = vmatprep.subr.mxu0 0.0
  %168 = vmatpush1.msra.mxu0 0.0
  %169 = vmatprep.mubr.f32.mxu0 0.0
  %170 = vmatmul.mubr.f32.gmra.mrb[0].mxu0 %v103
  %v171 = vpop.f32.mrb[0].mxu0
  %v172 = vadd.f32 %v101, %v171
  %v173 = vpop.f32.mrb[0].mxu0
  %174 = vdwg.mxu0
  %s175 = scalar_lea.vmem %s2, 16
  %176 = vst.msk [vmem:[%s175] sm:$0xff] %vm22, %v172
  %s177 = scalar_lea.vmem %s0, 16
  %v178 = vld [vmem:[%s177] sm:$0xff]
  %v180 = vsel %vm22, %v172, 0
  %182 = vmatprep.subr.mxu0 0.0
  %183 = vmatpush1.msra.mxu0 %v17
  %184 = vmatprep.subr.mxu0 0.0
  %185 = vmatpush1.msra.mxu0 %v18
  %186 = vmatprep.subr.mxu0 0.0
  %187 = vmatpush1.msra.mxu0 %v19
  %188 = vmatprep.subr.mxu0 0.0
  %189 = vmatpush1.msra.mxu0 %v20
  %190 = vmatprep.subr.mxu0 0.0
  %191 = vmatpush1.msra.mxu0 0.0
  %192 = vmatprep.subr.mxu0 0.0
  %193 = vmatpush1.msra.mxu0 0.0
  %194 = vmatprep.subr.mxu0 0.0
  %195 = vmatpush1.msra.mxu0 0.0
  %196 = vmatprep.subr.mxu0 0.0
  %197 = vmatpush1.msra.mxu0 0.0
  %198 = vmatprep.subr.mxu0 0.0
  %199 = vmatpush1.msra.mxu0 0.0
  %200 = vmatprep.subr.mxu0 0.0
  %201 = vmatpush1.msra.mxu0 0.0
  %202 = vmatprep.subr.mxu0 0.0
  %203 = vmatpush1.msra.mxu0 0.0
  %204 = vmatprep.subr.mxu0 0.0
  %205 = vmatpush1.msra.mxu0 0.0
  %206 = vmatprep.subr.mxu0 0.0
  %207 = vmatpush1.msra.mxu0 0.0
  %208 = vmatprep.subr.mxu0 0.0
  %209 = vmatpush1.msra.mxu0 0.0
  %210 = vmatprep.subr.mxu0 0.0
  %211 = vmatpush1.msra.mxu0 0.0
  %212 = vmatprep.subr.mxu0 0.0
  %213 = vmatpush1.msra.mxu0 0.0
  %214 = vmatprep.subr.mxu0 0.0
  %215 = vmatpush1.msra.mxu0 0.0
  %216 = vmatprep.subr.mxu0 0.0
  %217 = vmatpush1.msra.mxu0 0.0
  %218 = vmatprep.subr.mxu0 0.0
  %219 = vmatpush1.msra.mxu0 0.0
  %220 = vmatprep.subr.mxu0 0.0
  %221 = vmatpush1.msra.mxu0 0.0
  %222 = vmatprep.subr.mxu0 0.0
  %223 = vmatpush1.msra.mxu0 0.0
  %224 = vmatprep.subr.mxu0 0.0
  %225 = vmatpush1.msra.mxu0 0.0
  %226 = vmatprep.subr.mxu0 0.0
  %227 = vmatpush1.msra.mxu0 0.0
  %228 = vmatprep.subr.mxu0 0.0
  %229 = vmatpush1.msra.mxu0 0.0
  %230 = vmatprep.subr.mxu0 0.0
  %231 = vmatpush1.msra.mxu0 0.0
  %232 = vmatprep.subr.mxu0 0.0
  %233 = vmatpush1.msra.mxu0 0.0
  %234 = vmatprep.subr.mxu0 0.0
  %235 = vmatpush1.msra.mxu0 0.0
  %236 = vmatprep.subr.mxu0 0.0
  %237 = vmatpush1.msra.mxu0 0.0
  %238 = vmatprep.subr.mxu0 0.0
  %239 = vmatpush1.msra.mxu0 0.0
  %240 = vmatprep.subr.mxu0 0.0
  %241 = vmatpush1.msra.mxu0 0.0
  %242 = vmatprep.subr.mxu0 0.0
  %243 = vmatpush1.msra.mxu0 0.0
  %244 = vmatprep.subr.mxu0 0.0
  %245 = vmatpush1.msra.mxu0 0.0
  %246 = vmatprep.mubr.f32.mxu0 0.0
  %247 = vmatmul.mubr.f32.gmra.mrb[0].mxu0 %v180
  %v248 = vpop.f32.mrb[0].mxu0
  %v249 = vadd.f32 %v178, %v248
  %v250 = vpop.f32.mrb[0].mxu0
  %251 = vdwg.mxu0
  %s252 = scalar_lea.vmem %s2, 24
  %253 = vst.msk [vmem:[%s252] sm:$0xff] %vm22, %v249
  %s254 = scalar_lea.vmem %s0, 24
  %v255 = vld [vmem:[%s254] sm:$0xff]
  %v257 = vsel %vm22, %v249, 0
  %259 = vmatprep.subr.mxu0 0.0
  %260 = vmatpush1.msra.mxu0 %v17
  %261 = vmatprep.subr.mxu0 0.0
  %262 = vmatpush1.msra.mxu0 %v18
  %263 = vmatprep.subr.mxu0 0.0
  %264 = vmatpush1.msra.mxu0 %v19
  %265 = vmatprep.subr.mxu0 0.0
  %266 = vmatpush1.msra.mxu0 %v20
  %267 = vmatprep.subr.mxu0 0.0
  %268 = vmatpush1.msra.mxu0 0.0
  %269 = vmatprep.subr.mxu0 0.0
  %270 = vmatpush1.msra.mxu0 0.0
  %271 = vmatprep.subr.mxu0 0.0
  %272 = vmatpush1.msra.mxu0 0.0
  %273 = vmatprep.subr.mxu0 0.0
  %274 = vmatpush1.msra.mxu0 0.0
  %275 = vmatprep.subr.mxu0 0.0
  %276 = vmatpush1.msra.mxu0 0.0
  %277 = vmatprep.subr.mxu0 0.0
  %278 = vmatpush1.msra.mxu0 0.0
  %279 = vmatprep.subr.mxu0 0.0
  %280 = vmatpush1.msra.mxu0 0.0
  %281 = vmatprep.subr.mxu0 0.0
  %282 = vmatpush1.msra.mxu0 0.0
  %283 = vmatprep.subr.mxu0 0.0
  %284 = vmatpush1.msra.mxu0 0.0
  %285 = vmatprep.subr.mxu0 0.0
  %286 = vmatpush1.msra.mxu0 0.0
  %287 = vmatprep.subr.mxu0 0.0
  %288 = vmatpush1.msra.mxu0 0.0
  %289 = vmatprep.subr.mxu0 0.0
  %290 = vmatpush1.msra.mxu0 0.0
  %291 = vmatprep.subr.mxu0 0.0
  %292 = vmatpush1.msra.mxu0 0.0
  %293 = vmatprep.subr.mxu0 0.0
  %294 = vmatpush1.msra.mxu0 0.0
  %295 = vmatprep.subr.mxu0 0.0
  %296 = vmatpush1.msra.mxu0 0.0
  %297 = vmatprep.subr.mxu0 0.0
  %298 = vmatpush1.msra.mxu0 0.0
  %299 = vmatprep.subr.mxu0 0.0
  %300 = vmatpush1.msra.mxu0 0.0
  %301 = vmatprep.subr.mxu0 0.0
  %302 = vmatpush1.msra.mxu0 0.0
  %303 = vmatprep.subr.mxu0 0.0
  %304 = vmatpush1.msra.mxu0 0.0
  %305 = vmatprep.subr.mxu0 0.0
  %306 = vmatpush1.msra.mxu0 0.0
  %307 = vmatprep.subr.mxu0 0.0
  %308 = vmatpush1.msra.mxu0 0.0
  %309 = vmatprep.subr.mxu0 0.0
  %310 = vmatpush1.msra.mxu0 0.0
  %311 = vmatprep.subr.mxu0 0.0
  %312 = vmatpush1.msra.mxu0 0.0
  %313 = vmatprep.subr.mxu0 0.0
  %314 = vmatpush1.msra.mxu0 0.0
  %315 = vmatprep.subr.mxu0 0.0
  %316 = vmatpush1.msra.mxu0 0.0
  %317 = vmatprep.subr.mxu0 0.0
  %318 = vmatpush1.msra.mxu0 0.0
  %319 = vmatprep.subr.mxu0 0.0
  %320 = vmatpush1.msra.mxu0 0.0
  %321 = vmatprep.subr.mxu0 0.0
  %322 = vmatpush1.msra.mxu0 0.0
  %323 = vmatprep.mubr.f32.mxu0 0.0
  %324 = vmatmul.mubr.f32.gmra.mrb[0].mxu0 %v257
  %v325 = vpop.f32.mrb[0].mxu0
  %v326 = vadd.f32 %v255, %v325
  %v327 = vpop.f32.mrb[0].mxu0
  %328 = vdwg.mxu0
  %s329 = scalar_lea.vmem %s2, 32
  %330 = vst.msk [vmem:[%s329] sm:$0xff] %vm22, %v326
  %s331 = scalar_lea.vmem %s0, 32
  %v332 = vld [vmem:[%s331] sm:$0xff]
  %v334 = vsel %vm22, %v326, 0
  %336 = vmatprep.subr.mxu0 0.0
  %337 = vmatpush1.msra.mxu0 %v17
  %338 = vmatprep.subr.mxu0 0.0
  %339 = vmatpush1.msra.mxu0 %v18
  %340 = vmatprep.subr.mxu0 0.0
  %341 = vmatpush1.msra.mxu0 %v19
  %342 = vmatprep.subr.mxu0 0.0
  %343 = vmatpush1.msra.mxu0 %v20
  %344 = vmatprep.subr.mxu0 0.0
  %345 = vmatpush1.msra.mxu0 0.0
  %346 = vmatprep.subr.mxu0 0.0
  %347 = vmatpush1.msra.mxu0 0.0
  %348 = vmatprep.subr.mxu0 0.0
  %349 = vmatpush1.msra.mxu0 0.0
  %350 = vmatprep.subr.mxu0 0.0
  %351 = vmatpush1.msra.mxu0 0.0
  %352 = vmatprep.subr.mxu0 0.0
  %353 = vmatpush1.msra.mxu0 0.0
  %354 = vmatprep.subr.mxu0 0.0
  %355 = vmatpush1.msra.mxu0 0.0
  %356 = vmatprep.subr.mxu0 0.0
  %357 = vmatpush1.msra.mxu0 0.0
  %358 = vmatprep.subr.mxu0 0.0
  %359 = vmatpush1.msra.mxu0 0.0
  %360 = vmatprep.subr.mxu0 0.0
  %361 = vmatpush1.msra.mxu0 0.0
  %362 = vmatprep.subr.mxu0 0.0
  %363 = vmatpush1.msra.mxu0 0.0
  %364 = vmatprep.subr.mxu0 0.0
  %365 = vmatpush1.msra.mxu0 0.0
  %366 = vmatprep.subr.mxu0 0.0
  %367 = vmatpush1.msra.mxu0 0.0
  %368 = vmatprep.subr.mxu0 0.0
  %369 = vmatpush1.msra.mxu0 0.0
  %370 = vmatprep.subr.mxu0 0.0
  %371 = vmatpush1.msra.mxu0 0.0
  %372 = vmatprep.subr.mxu0 0.0
  %373 = vmatpush1.msra.mxu0 0.0
  %374 = vmatprep.subr.mxu0 0.0
  %375 = vmatpush1.msra.mxu0 0.0
  %376 = vmatprep.subr.mxu0 0.0
  %377 = vmatpush1.msra.mxu0 0.0
  %378 = vmatprep.subr.mxu0 0.0
  %379 = vmatpush1.msra.mxu0 0.0
  %380 = vmatprep.subr.mxu0 0.0
  %381 = vmatpush1.msra.mxu0 0.0
  %382 = vmatprep.subr.mxu0 0.0
  %383 = vmatpush1.msra.mxu0 0.0
  %384 = vmatprep.subr.mxu0 0.0
  %385 = vmatpush1.msra.mxu0 0.0
  %386 = vmatprep.subr.mxu0 0.0
  %387 = vmatpush1.msra.mxu0 0.0
  %388 = vmatprep.subr.mxu0 0.0
  %389 = vmatpush1.msra.mxu0 0.0
  %390 = vmatprep.subr.mxu0 0.0
  %391 = vmatpush1.msra.mxu0 0.0
  %392 = vmatprep.subr.mxu0 0.0
  %393 = vmatpush1.msra.mxu0 0.0
  %394 = vmatprep.subr.mxu0 0.0
  %395 = vmatpush1.msra.mxu0 0.0
  %396 = vmatprep.subr.mxu0 0.0
  %397 = vmatpush1.msra.mxu0 0.0
  %398 = vmatprep.subr.mxu0 0.0
  %399 = vmatpush1.msra.mxu0 0.0
  %400 = vmatprep.mubr.f32.mxu0 0.0
  %401 = vmatmul.mubr.f32.gmra.mrb[0].mxu0 %v334
  %v402 = vpop.f32.mrb[0].mxu0
  %v403 = vadd.f32 %v332, %v402
  %v404 = vpop.f32.mrb[0].mxu0
  %405 = vdwg.mxu0
  %s406 = scalar_lea.vmem %s2, 40
  %407 = vst.msk [vmem:[%s406] sm:$0xff] %vm22, %v403
  %s408 = scalar_lea.vmem %s0, 40
  %v409 = vld [vmem:[%s408] sm:$0xff]
  %v411 = vsel %vm22, %v403, 0
  %413 = vmatprep.subr.mxu0 0.0
  %414 = vmatpush1.msra.mxu0 %v17
  %415 = vmatprep.subr.mxu0 0.0
  %416 = vmatpush1.msra.mxu0 %v18
  %417 = vmatprep.subr.mxu0 0.0
  %418 = vmatpush1.msra.mxu0 %v19
  %419 = vmatprep.subr.mxu0 0.0
  %420 = vmatpush1.msra.mxu0 %v20
  %421 = vmatprep.subr.mxu0 0.0
  %422 = vmatpush1.msra.mxu0 0.0
  %423 = vmatprep.subr.mxu0 0.0
  %424 = vmatpush1.msra.mxu0 0.0
  %425 = vmatprep.subr.mxu0 0.0
  %426 = vmatpush1.msra.mxu0 0.0
  %427 = vmatprep.subr.mxu0 0.0
  %428 = vmatpush1.msra.mxu0 0.0
  %429 = vmatprep.subr.mxu0 0.0
  %430 = vmatpush1.msra.mxu0 0.0
  %431 = vmatprep.subr.mxu0 0.0
  %432 = vmatpush1.msra.mxu0 0.0
  %433 = vmatprep.subr.mxu0 0.0
  %434 = vmatpush1.msra.mxu0 0.0
  %435 = vmatprep.subr.mxu0 0.0
  %436 = vmatpush1.msra.mxu0 0.0
  %437 = vmatprep.subr.mxu0 0.0
  %438 = vmatpush1.msra.mxu0 0.0
  %439 = vmatprep.subr.mxu0 0.0
  %440 = vmatpush1.msra.mxu0 0.0
  %441 = vmatprep.subr.mxu0 0.0
  %442 = vmatpush1.msra.mxu0 0.0
  %443 = vmatprep.subr.mxu0 0.0
  %444 = vmatpush1.msra.mxu0 0.0
  %445 = vmatprep.subr.mxu0 0.0
  %446 = vmatpush1.msra.mxu0 0.0
  %447 = vmatprep.subr.mxu0 0.0
  %448 = vmatpush1.msra.mxu0 0.0
  %449 = vmatprep.subr.mxu0 0.0
  %450 = vmatpush1.msra.mxu0 0.0
  %451 = vmatprep.subr.mxu0 0.0
  %452 = vmatpush1.msra.mxu0 0.0
  %453 = vmatprep.subr.mxu0 0.0
  %454 = vmatpush1.msra.mxu0 0.0
  %455 = vmatprep.subr.mxu0 0.0
  %456 = vmatpush1.msra.mxu0 0.0
  %457 = vmatprep.subr.mxu0 0.0
  %458 = vmatpush1.msra.mxu0 0.0
  %459 = vmatprep.subr.mxu0 0.0
  %460 = vmatpush1.msra.mxu0 0.0
  %461 = vmatprep.subr.mxu0 0.0
  %462 = vmatpush1.msra.mxu0 0.0
  %463 = vmatprep.subr.mxu0 0.0
  %464 = vmatpush1.msra.mxu0 0.0
  %465 = vmatprep.subr.mxu0 0.0
  %466 = vmatpush1.msra.mxu0 0.0
  %467 = vmatprep.subr.mxu0 0.0
  %468 = vmatpush1.msra.mxu0 0.0
  %469 = vmatprep.subr.mxu0 0.0
  %470 = vmatpush1.msra.mxu0 0.0
  %471 = vmatprep.subr.mxu0 0.0
  %472 = vmatpush1.msra.mxu0 0.0
  %473 = vmatprep.subr.mxu0 0.0
  %474 = vmatpush1.msra.mxu0 0.0
  %475 = vmatprep.subr.mxu0 0.0
  %476 = vmatpush1.msra.mxu0 0.0
  %477 = vmatprep.mubr.f32.mxu0 0.0
  %478 = vmatmul.mubr.f32.gmra.mrb[0].mxu0 %v411
  %v479 = vpop.f32.mrb[0].mxu0
  %v480 = vadd.f32 %v409, %v479
  %v481 = vpop.f32.mrb[0].mxu0
  %482 = vdwg.mxu0
  %s483 = scalar_lea.vmem %s2, 48
  %484 = vst.msk [vmem:[%s483] sm:$0xff] %vm22, %v480
  %s485 = scalar_lea.vmem %s0, 48
  %v486 = vld [vmem:[%s485] sm:$0xff]
  %v488 = vsel %vm22, %v480, 0
  %490 = vmatprep.subr.mxu0 0.0
  %491 = vmatpush1.msra.mxu0 %v17
  %492 = vmatprep.subr.mxu0 0.0
  %493 = vmatpush1.msra.mxu0 %v18
  %494 = vmatprep.subr.mxu0 0.0
  %495 = vmatpush1.msra.mxu0 %v19
  %496 = vmatprep.subr.mxu0 0.0
  %497 = vmatpush1.msra.mxu0 %v20
  %498 = vmatprep.subr.mxu0 0.0
  %499 = vmatpush1.msra.mxu0 0.0
  %500 = vmatprep.subr.mxu0 0.0
  %501 = vmatpush1.msra.mxu0 0.0
  %502 = vmatprep.subr.mxu0 0.0
  %503 = vmatpush1.msra.mxu0 0.0
  %504 = vmatprep.subr.mxu0 0.0
  %505 = vmatpush1.msra.mxu0 0.0
  %506 = vmatprep.subr.mxu0 0.0
  %507 = vmatpush1.msra.mxu0 0.0
  %508 = vmatprep.subr.mxu0 0.0
  %509 = vmatpush1.msra.mxu0 0.0
  %510 = vmatprep.subr.mxu0 0.0
  %511 = vmatpush1.msra.mxu0 0.0
  %512 = vmatprep.subr.mxu0 0.0
  %513 = vmatpush1.msra.mxu0 0.0
  %514 = vmatprep.subr.mxu0 0.0
  %515 = vmatpush1.msra.mxu0 0.0
  %516 = vmatprep.subr.mxu0 0.0
  %517 = vmatpush1.msra.mxu0 0.0
  %518 = vmatprep.subr.mxu0 0.0
  %519 = vmatpush1.msra.mxu0 0.0
  %520 = vmatprep.subr.mxu0 0.0
  %521 = vmatpush1.msra.mxu0 0.0
  %522 = vmatprep.subr.mxu0 0.0
  %523 = vmatpush1.msra.mxu0 0.0
  %524 = vmatprep.subr.mxu0 0.0
  %525 = vmatpush1.msra.mxu0 0.0
  %526 = vmatprep.subr.mxu0 0.0
  %527 = vmatpush1.msra.mxu0 0.0
  %528 = vmatprep.subr.mxu0 0.0
  %529 = vmatpush1.msra.mxu0 0.0
  %530 = vmatprep.subr.mxu0 0.0
  %531 = vmatpush1.msra.mxu0 0.0
  %532 = vmatprep.subr.mxu0 0.0
  %533 = vmatpush1.msra.mxu0 0.0
  %534 = vmatprep.subr.mxu0 0.0
  %535 = vmatpush1.msra.mxu0 0.0
  %536 = vmatprep.subr.mxu0 0.0
  %537 = vmatpush1.msra.mxu0 0.0
  %538 = vmatprep.subr.mxu0 0.0
  %539 = vmatpush1.msra.mxu0 0.0
  %540 = vmatprep.subr.mxu0 0.0
  %541 = vmatpush1.msra.mxu0 0.0
  %542 = vmatprep.subr.mxu0 0.0
  %543 = vmatpush1.msra.mxu0 0.0
  %544 = vmatprep.subr.mxu0 0.0
  %545 = vmatpush1.msra.mxu0 0.0
  %546 = vmatprep.subr.mxu0 0.0
  %547 = vmatpush1.msra.mxu0 0.0
  %548 = vmatprep.subr.mxu0 0.0
  %549 = vmatpush1.msra.mxu0 0.0
  %550 = vmatprep.subr.mxu0 0.0
  %551 = vmatpush1.msra.mxu0 0.0
  %552 = vmatprep.subr.mxu0 0.0
  %553 = vmatpush1.msra.mxu0 0.0
  %554 = vmatprep.mubr.f32.mxu0 0.0
  %555 = vmatmul.mubr.f32.gmra.mrb[0].mxu0 %v488
  %v556 = vpop.f32.mrb[0].mxu0
  %v557 = vadd.f32 %v486, %v556
  %v558 = vpop.f32.mrb[0].mxu0
  %559 = vdwg.mxu0
  %s560 = scalar_lea.vmem %s2, 56
  %561 = vst.msk [vmem:[%s560] sm:$0xff] %vm22, %v557
  %s562 = scalar_lea.vmem %s0, 56
  %v563 = vld [vmem:[%s562] sm:$0xff]
  %v565 = vsel %vm22, %v557, 0
  %567 = vmatprep.subr.mxu0 0.0
  %568 = vmatpush1.msra.mxu0 %v17
  %569 = vmatprep.subr.mxu0 0.0
  %570 = vmatpush1.msra.mxu0 %v18
  %571 = vmatprep.subr.mxu0 0.0
  %572 = vmatpush1.msra.mxu0 %v19
  %573 = vmatprep.subr.mxu0 0.0
  %574 = vmatpush1.msra.mxu0 %v20
  %575 = vmatprep.subr.mxu0 0.0
  %576 = vmatpush1.msra.mxu0 0.0
  %577 = vmatprep.subr.mxu0 0.0
  %578 = vmatpush1.msra.mxu0 0.0
  %579 = vmatprep.subr.mxu0 0.0
  %580 = vmatpush1.msra.mxu0 0.0
  %581 = vmatprep.subr.mxu0 0.0
  %582 = vmatpush1.msra.mxu0 0.0
  %583 = vmatprep.subr.mxu0 0.0
  %584 = vmatpush1.msra.mxu0 0.0
  %585 = vmatprep.subr.mxu0 0.0
  %586 = vmatpush1.msra.mxu0 0.0
  %587 = vmatprep.subr.mxu0 0.0
  %588 = vmatpush1.msra.mxu0 0.0
  %589 = vmatprep.subr.mxu0 0.0
  %590 = vmatpush1.msra.mxu0 0.0
  %591 = vmatprep.subr.mxu0 0.0
  %592 = vmatpush1.msra.mxu0 0.0
  %593 = vmatprep.subr.mxu0 0.0
  %594 = vmatpush1.msra.mxu0 0.0
  %595 = vmatprep.subr.mxu0 0.0
  %596 = vmatpush1.msra.mxu0 0.0
  %597 = vmatprep.subr.mxu0 0.0
  %598 = vmatpush1.msra.mxu0 0.0
  %599 = vmatprep.subr.mxu0 0.0
  %600 = vmatpush1.msra.mxu0 0.0
  %601 = vmatprep.subr.mxu0 0.0
  %602 = vmatpush1.msra.mxu0 0.0
  %603 = vmatprep.subr.mxu0 0.0
  %604 = vmatpush1.msra.mxu0 0.0
  %605 = vmatprep.subr.mxu0 0.0
  %606 = vmatpush1.msra.mxu0 0.0
  %607 = vmatprep.subr.mxu0 0.0
  %608 = vmatpush1.msra.mxu0 0.0
  %609 = vmatprep.subr.mxu0 0.0
  %610 = vmatpush1.msra.mxu0 0.0
  %611 = vmatprep.subr.mxu0 0.0
  %612 = vmatpush1.msra.mxu0 0.0
  %613 = vmatprep.subr.mxu0 0.0
  %614 = vmatpush1.msra.mxu0 0.0
  %615 = vmatprep.subr.mxu0 0.0
  %616 = vmatpush1.msra.mxu0 0.0
  %617 = vmatprep.subr.mxu0 0.0
  %618 = vmatpush1.msra.mxu0 0.0
  %619 = vmatprep.subr.mxu0 0.0
  %620 = vmatpush1.msra.mxu0 0.0
  %621 = vmatprep.subr.mxu0 0.0
  %622 = vmatpush1.msra.mxu0 0.0
  %623 = vmatprep.subr.mxu0 0.0
  %624 = vmatpush1.msra.mxu0 0.0
  %625 = vmatprep.subr.mxu0 0.0
  %626 = vmatpush1.msra.mxu0 0.0
  %627 = vmatprep.subr.mxu0 0.0
  %628 = vmatpush1.msra.mxu0 0.0
  %629 = vmatprep.subr.mxu0 0.0
  %630 = vmatpush1.msra.mxu0 0.0
  %631 = vmatprep.mubr.f32.mxu0 0.0
  %632 = vmatmul.mubr.f32.gmra.mrb[0].mxu0 %v565
  %v633 = vpop.f32.mrb[0].mxu0
  %v634 = vadd.f32 %v563, %v633
  %v635 = vpop.f32.mrb[0].mxu0
  %636 = vdwg.mxu0
  %637 = vst.msk [vmem:[#allocation2] sm:$0xff] %vm22, %v634
  // Predicated region
  $region14: #{custom_rnn_forward.2} parent=0 // pred_check
    _
  $region15: #{custom_rnn_forward.2} parent=0 // pred_check_branch
    %639 = sbr.rel (0) target = $region17
  $region16: #{custom_rnn_forward.2} parent=0 // pred_region
    _
  $region17: #{custom_rnn_forward.2} parent=0 // pred_fallthru
    _
  // Predicated region
  $region18: #{custom_rnn_forward.2} parent=0 // pred_check
    _
  $region19: #{custom_rnn_forward.2} parent=0 // pred_check_branch
    %641 = sbr.rel (0) target = $region21
  $region20: #{custom_rnn_forward.2} parent=0 // pred_region
    _
  $region21: #{custom_rnn_forward.2} parent=0 // pred_fallthru
    _

</llo_original>
